<compile_context>
chip_gen: v7x
topology: tpu7x:2x2x1
jax: 0.10.0
libtpu: 0.0.40
codegen_flags: <defaults>
</compile_context>

<pallas_src>
import numpy as np
import jax
import jax.numpy as jnp
from jax.experimental import pallas as pl
from jax.experimental.pallas import tpu as pltpu

_LANES = 128
_SUBLANES = 8


# ---------------------------------------------------------------------------
# Kernel builder: incidence matrix / bias baked in as Python constants
# ---------------------------------------------------------------------------
def _make_e2h_kernel(weight_pe, bias_p):
    """Per output point p: out[p] = sum_{e incident} x[e]  (+ bias[p]).

    Only exact 0/1 incidence matrices are supported (that is what
    E2HTransform builds); arbitrary dense weights would need a real matmul.
    """
    weight_pe = np.asarray(weight_pe, dtype=np.float32)   # (P, E) 0/1
    bias_p = np.asarray(bias_p, dtype=np.float32)         # (P,)
    P, E = weight_pe.shape

    edges_of_point = [tuple(e for e in range(E) if weight_pe[p, e] > 0.5)
                      for p in range(P)]
    bias_vals = [float(bias_p[p]) for p in range(P)]

    def kernel(x_ref, o_ref):
        # x_ref: (1, E, TR, 128)   o_ref: (1, P, TR, 128)  -- dense slabs.
        slab_shape = x_ref.shape[2:]                       # (TR, 128)
        x = [x_ref[0, e] for e in range(E)]                # one load per edge
        for p in range(P):
            es = edges_of_point[p]
            b = bias_vals[p]
            if not es:
                # Point covered by no edge -> output is just the bias value.
                o_ref[0, p] = jnp.full(slab_shape, b, o_ref.dtype)
                continue
            acc = x[es[0]]
            for e in es[1:]:
                acc = acc + x[e]                           # full-vreg VPU adds
            if b != 0.0:
                acc = acc + jnp.asarray(b, dtype=acc.dtype)
            o_ref[0, p] = acc.astype(o_ref.dtype)

    return kernel


# ---------------------------------------------------------------------------
# Tiling helper
# ---------------------------------------------------------------------------
def _pick_row_tile(R, n_streams, itemsize, batch, budget_bytes=8 << 20):
    """Largest multiple of 8 dividing R whose double-buffered in+out blocks
    stay under `budget_bytes`.  When batch == 1, keep >= 2 spatial grid steps
    so v7x's two TensorCores can split the 'parallel' axis."""
    assert R % _SUBLANES == 0
    bytes_per_row = 2 * n_streams * _LANES * itemsize      # double-buffered
    cap = max(_SUBLANES, budget_bytes // bytes_per_row)
    if batch == 1 and R >= 2 * _SUBLANES:
        cap = min(cap, R // 2)
    best = _SUBLANES
    tr = _SUBLANES
    while tr <= min(R, cap):
        if R % tr == 0:
            best = tr
        tr += _SUBLANES
    return best


# ---------------------------------------------------------------------------
# pallas_call wrapper
# ---------------------------------------------------------------------------
def e2h_pallas(edgemaps, weight_pe, bias_p):
    """edgemaps: (N, E, H, W) -> (N, P, H, W); out = W @ x + b (1x1 conv)."""
    N, E, H, W = edgemaps.shape
    P = int(np.asarray(weight_pe).shape[0])
    S = H * W

    # Spatial on both sublane and lane axes: (N, E, R, 128), R multiple of 8.
    tile_elems = _SUBLANES * _LANES
    S_pad = pl.cdiv(S, tile_elems) * tile_elems
    R = S_pad // _LANES

    x = edgemaps.reshape(N, E, S)
    if S_pad != S:
        x = jnp.pad(x, ((0, 0), (0, 0), (0, S_pad - S)))
    x = x.reshape(N, E, R, _LANES)

    itemsize = x.dtype.itemsize
    TR = _pick_row_tile(R, E + P, itemsize, N)
    assert R % TR == 0

    # True (dense, double-buffered) VMEM footprint + margin for temporaries.
    block_bytes = (E + P) * TR * _LANES * itemsize
    vmem_limit = int(min(max(4 * block_bytes + (2 << 20), 8 << 20), 32 << 20))

    kernel = _make_e2h_kernel(weight_pe, bias_p)

    out = pl.pallas_call(
        kernel,
        out_shape=jax.ShapeDtypeStruct((N, P, R, _LANES), x.dtype),
        grid_spec=pltpu.PrefetchScalarGridSpec(
            num_scalar_prefetch=0,
            grid=(N, R // TR),
            in_specs=[pl.BlockSpec((1, E, TR, _LANES), lambda n, r: (n, 0, r, 0))],
            out_specs=pl.BlockSpec((1, P, TR, _LANES), lambda n, r: (n, 0, r, 0)),
        ),
        compiler_params=pltpu.CompilerParams(
            dimension_semantics=("parallel", "parallel"),
            vmem_limit_bytes=vmem_limit,
        ),
    )(x)

    out = out.reshape(N, P, S_pad)
    if S_pad != S:
        out = out[:, :, :S]
    return out.reshape(N, P, H, W)


# ---------------------------------------------------------------------------
# Module-equivalent wrapper (matches the PyTorch E2HTransform forward)
# ---------------------------------------------------------------------------
class E2HTransformPallas:
    def __init__(self, edge_info, num_points, num_edges):
        e2h = np.zeros([num_points, num_edges], dtype=np.float32)
        for edge_id, (is_closed, indices) in enumerate(edge_info):
            for point_id in indices:
                e2h[point_id, edge_id] = 1.0
        self.num_points = num_points
        self.num_edges = num_edges
        self.weight_pe = e2h                                           # (P, E) 0/1
        self.bias = (e2h @ np.ones(num_edges, np.float32) < 0.5).astype(np.float32)

    def __call__(self, edgemaps):
        # edgemaps: NCHW (N, E, H, W); wrapper does only reshapes / (rare) pad.
        N, E, H, W = edgemaps.shape
        assert E == self.num_edges
        return e2h_pallas(edgemaps, self.weight_pe, self.bias)


if __name__ == "__main__":
    # Small deterministic setup: 5 keypoints, 3 edges (point 4 uncovered -> bias 1)
    edge_info = [
        (False, [0, 1]),
        (True, [1, 2, 3]),
        (False, [3]),
    ]
    num_points, num_edges = 5, 3

    module = E2HTransformPallas(edge_info, num_points, num_edges)

    key = jax.random.PRNGKey(0)
    N, H, W = 2, 16, 16
    edgemaps = jax.random.normal(key, (N, num_edges, H, W), dtype=jnp.float32)

    out = jax.block_until_ready(module(edgemaps))

    # Reference check (plain JAX einsum, equivalent to F.conv2d with 1x1 kernel)
    ref = jnp.einsum("pe,nehw->nphw", jnp.asarray(module.weight_pe), edgemaps) \
        + jnp.asarray(module.bias)[None, :, None, None]
    assert out.shape == (N, num_points, H, W)
    np.testing.assert_allclose(np.asarray(out), np.asarray(ref),
                               rtol=1e-5, atol=1e-5)

    print("KERNEL_OK")
</pallas_src>

<mosaic_0001>
module attributes {stable_mosaic.version = 11 : i64} {
  func.func @kernel(%arg0: i32, %arg1: i32, %arg2: memref<1x3x8x128xf32, #tpu.memory_space<vmem>>, %arg3: memref<1x5x8x128xf32, #tpu.memory_space<vmem>>) attributes {dimension_semantics = [#tpu.dimension_semantics<parallel>, #tpu.dimension_semantics<parallel>], iteration_bounds = array<i64: 2, 1>, scalar_prefetch = 0 : i64, scratch_operands = 0 : i64, tpu.core_type = #tpu.core_type<tc>, window_params = [{transform_indices = @transform_0, window_bounds = array<i64: 1, 3, 8, 128>}, {transform_indices = @transform_1, window_bounds = array<i64: 1, 5, 8, 128>}]} {
    %c0 = arith.constant 0 : index
    %c0_0 = arith.constant 0 : index
    %c0_1 = arith.constant 0 : index
    %c0_2 = arith.constant 0 : index
    %0 = vector.load %arg2[%c0, %c0_0, %c0_1, %c0_2] : memref<1x3x8x128xf32, #tpu.memory_space<vmem>>, vector<1x1x8x128xf32>
    %1 = vector.shape_cast %0 : vector<1x1x8x128xf32> to vector<8x128xf32>
    %c0_3 = arith.constant 0 : index
    %c1 = arith.constant 1 : index
    %c0_4 = arith.constant 0 : index
    %c0_5 = arith.constant 0 : index
    %2 = vector.load %arg2[%c0_3, %c1, %c0_4, %c0_5] : memref<1x3x8x128xf32, #tpu.memory_space<vmem>>, vector<1x1x8x128xf32>
    %3 = vector.shape_cast %2 : vector<1x1x8x128xf32> to vector<8x128xf32>
    %c0_6 = arith.constant 0 : index
    %c2 = arith.constant 2 : index
    %c0_7 = arith.constant 0 : index
    %c0_8 = arith.constant 0 : index
    %4 = vector.load %arg2[%c0_6, %c2, %c0_7, %c0_8] : memref<1x3x8x128xf32, #tpu.memory_space<vmem>>, vector<1x1x8x128xf32>
    %5 = vector.shape_cast %4 : vector<1x1x8x128xf32> to vector<8x128xf32>
    %c0_9 = arith.constant 0 : index
    %c0_10 = arith.constant 0 : index
    %c0_11 = arith.constant 0 : index
    %c0_12 = arith.constant 0 : index
    %6 = vector.load %arg3[%c0_9, %c0_10, %c0_11, %c0_12] : memref<1x5x8x128xf32, #tpu.memory_space<vmem>>, vector<1x1x8x128xf32>
    %7 = vector.shape_cast %6 : vector<1x1x8x128xf32> to vector<8x128xf32>
    %8 = vector.shape_cast %1 : vector<8x128xf32> to vector<1x1x8x128xf32>
    tpu.vector_store %arg3[%c0_9, %c0_10, %c0_11, %c0_12], %8 {strides = array<i32>} : memref<1x5x8x128xf32, #tpu.memory_space<vmem>>, vector<1x1x8x128xf32>,
    %9 = arith.addf %1, %3 : vector<8x128xf32>
    %c0_13 = arith.constant 0 : index
    %c1_14 = arith.constant 1 : index
    %c0_15 = arith.constant 0 : index
    %c0_16 = arith.constant 0 : index
    %10 = vector.load %arg3[%c0_13, %c1_14, %c0_15, %c0_16] : memref<1x5x8x128xf32, #tpu.memory_space<vmem>>, vector<1x1x8x128xf32>
    %11 = vector.shape_cast %10 : vector<1x1x8x128xf32> to vector<8x128xf32>
    %12 = vector.shape_cast %9 : vector<8x128xf32> to vector<1x1x8x128xf32>
    tpu.vector_store %arg3[%c0_13, %c1_14, %c0_15, %c0_16], %12 {strides = array<i32>} : memref<1x5x8x128xf32, #tpu.memory_space<vmem>>, vector<1x1x8x128xf32>,
    %c0_17 = arith.constant 0 : index
    %c2_18 = arith.constant 2 : index
    %c0_19 = arith.constant 0 : index
    %c0_20 = arith.constant 0 : index
    %13 = vector.load %arg3[%c0_17, %c2_18, %c0_19, %c0_20] : memref<1x5x8x128xf32, #tpu.memory_space<vmem>>, vector<1x1x8x128xf32>
    %14 = vector.shape_cast %13 : vector<1x1x8x128xf32> to vector<8x128xf32>
    %15 = vector.shape_cast %3 : vector<8x128xf32> to vector<1x1x8x128xf32>
    tpu.vector_store %arg3[%c0_17, %c2_18, %c0_19, %c0_20], %15 {strides = array<i32>} : memref<1x5x8x128xf32, #tpu.memory_space<vmem>>, vector<1x1x8x128xf32>,
    %16 = arith.addf %3, %5 : vector<8x128xf32>
    %c0_21 = arith.constant 0 : index
    %c3 = arith.constant 3 : index
    %c0_22 = arith.constant 0 : index
    %c0_23 = arith.constant 0 : index
    %17 = vector.load %arg3[%c0_21, %c3, %c0_22, %c0_23] : memref<1x5x8x128xf32, #tpu.memory_space<vmem>>, vector<1x1x8x128xf32>
    %18 = vector.shape_cast %17 : vector<1x1x8x128xf32> to vector<8x128xf32>
    %19 = vector.shape_cast %16 : vector<8x128xf32> to vector<1x1x8x128xf32>
    tpu.vector_store %arg3[%c0_21, %c3, %c0_22, %c0_23], %19 {strides = array<i32>} : memref<1x5x8x128xf32, #tpu.memory_space<vmem>>, vector<1x1x8x128xf32>,
    %cst = arith.constant 1.000000e+00 : f32
    %20 = vector.broadcast %cst : f32 to vector<8x128xf32>
    %c0_24 = arith.constant 0 : index
    %c4 = arith.constant 4 : index
    %c0_25 = arith.constant 0 : index
    %c0_26 = arith.constant 0 : index
    %21 = vector.load %arg3[%c0_24, %c4, %c0_25, %c0_26] : memref<1x5x8x128xf32, #tpu.memory_space<vmem>>, vector<1x1x8x128xf32>
    %22 = vector.shape_cast %21 : vector<1x1x8x128xf32> to vector<8x128xf32>
    %23 = vector.shape_cast %20 : vector<8x128xf32> to vector<1x1x8x128xf32>
    tpu.vector_store %arg3[%c0_24, %c4, %c0_25, %c0_26], %23 {strides = array<i32>} : memref<1x5x8x128xf32, #tpu.memory_space<vmem>>, vector<1x1x8x128xf32>,
    return
  }
  func.func @transform_0(%arg0: i32, %arg1: i32) -> (i32, i32, i32, i32) {
    %c0_i32 = arith.constant 0 : i32
    %c0_i32_0 = arith.constant 0 : i32
    %c0_i32_1 = arith.constant 0 : i32
    return %arg0, %c0_i32, %arg1, %c0_i32_0 : i32, i32, i32, i32
  }
  func.func @transform_1(%arg0: i32, %arg1: i32) -> (i32, i32, i32, i32) {
    %c0_i32 = arith.constant 0 : i32
    %c0_i32_0 = arith.constant 0 : i32
    %c0_i32_1 = arith.constant 0 : i32
    return %arg0, %c0_i32, %arg1, %c0_i32_0 : i32, i32, i32, i32
  }
}

</mosaic_0001>

<llo_original>
// kernel: tpu_custom_call.1
$region0: #{tpu_custom_call.1}
  #allocation0 [shape = 'u32[]', space=smem, size = 0x4, offset = 0x4, fixed_abs, tag = 'smem constant byte address 0x4 - core index']
  #allocation1 [shape = 'u32[144,128]{1,0:T(1,128)}', space=vmem, size = 0x12000, scoped, tag = 'internal scratch']
  %s0 = inlined_call_operand.hbm [shape: f32[2,3,8,128], index: 0, kind: input, shape index: {}]
  %s1 = inlined_call_operand.hbm [shape: f32[2,5,8,128], index: 1, kind: output, shape index: {}]
  %s2 = sld [smem:[#allocation0]]
  $region41: #{tpu_custom_call.1} parent=0
    _
  %s4 = ssub.s32 1, %s2
  %s5 = scalar_select 0, %s4, %s2
  $region1: #{tpu_custom_call.1} parent=0
    #allocation2 [shape = 'u8[24576]{0}', space=vmem, size = 0x6000, scoped, tag = 'input window, operand 0']
    #allocation3 [shape = 's32[2]{0}', space=sflag, size = 0x8, scoped, tag = 'scoped memory for tpu_custom_call.1']
    #allocation4 [shape = 's32[2]{0}', space=sflag, size = 0x8, scoped, tag = 'scoped memory for tpu_custom_call.1']
    #allocation5 [shape = 'u8[40960]{0}', space=vmem, size = 0xa000, scoped, tag = 'output window, operand 0']
    %6 = vsyncpa [#allocation3], 0
    %s7 = scalar_lea.sflag [#allocation3], 1
    %8 = vsyncpa %s7, 0
    %9 = vsyncpa [#allocation4], 0
    %s10 = scalar_lea.sflag [#allocation4], 1
    %11 = vsyncpa %s10, 0
    loop: start=0, step=1, limit=4
    $region2: #{tpu_custom_call.1} parent=1 // loop_pre_header
      _
    $region3: #{tpu_custom_call.1} parent=1 // loop_header
      %s13 = sphi 0, %s17
      %p14 = scmp.ge.s32.totalorder %s13, 4
      %s20 = sphi 0, %s32
      %s21 = sphi 0, %s28
      %s22 = sphi 0, %s20
      %s23 = sphi 0, %s21
      %s24 = sphi 0, %s22
      %s25 = sphi 0, %s23
      %s37 = sphi 0, %s39
      %s40 = sphi 0, %s37
      %s41 = sphi 0, %s40
      %s57 = sphi 0, %s41
      %s65 = sphi 0, %s67
      %s68 = sphi 0, %s65
      %s69 = sphi 0, %s68
      %s85 = sphi 0, %s69
    $region4: #{tpu_custom_call.1} parent=1 // loop_header_branch
      %16 = sbr.rel (%p14) target = $region8
    $region5: #{tpu_custom_call.1} parent=1 // loop_body
      %s18 = ssub.s32 %s13, 1
      %s19 = ssub.s32 %s13, 2
      %s26 = sadd.s32 1, %s21
      %p27 = scmp.ge.s32.totalorder %s26, 1
      %s28 = scalar_select %p27, 0, %s26
      %s29 = sadd.s32 1, %s20
      %s30 = scalar_select %p27, %s29, %s20
      %p31 = scmp.ge.s32.totalorder %s30, 2
      %s32 = scalar_select %p31, 0, %s30
      %s33 = ssub.s32 %s20, %s32
      %s34 = ssub.s32 %s21, %s28
      %s35 = sor.u32 %s33, %s34
      %p36 = scmp.eq.s32.totalorder %s35, 0
      %s38 = sadd.s32 %s37, 1
      %s39 = scalar_select %p36, %s37, %s38
      %p42 = pneg %p36
      %p43 = scmp.eq.s32.totalorder %s13, 1
      %p44 = por %p42, %p43
      %p45 = scmp.ne.s32.totalorder %s37, %s40
      %p46 = scmp.eq.s32.totalorder %s13, 0
      %p47 = por %p45, %p46
      %p48 = scmp.ne.s32.totalorder %s37, %s40
      %p49 = scmp.eq.s32.totalorder %s18, 1
      %p50 = por %p48, %p49
      %p51 = scmp.ne.s32.totalorder %s40, %s41
      %p52 = scmp.eq.s32.totalorder %s18, 0
      %p53 = por %p51, %p52
      %p54 = scmp.ne.s32.totalorder %s40, %s41
      %p55 = scmp.eq.s32.totalorder %s19, 1
      %p56 = por %p54, %p55
      %p58 = scmp.ne.s32.totalorder %s41, %s57
      %p59 = scmp.eq.s32.totalorder %s19, 0
      %p60 = por %p58, %p59
      %s61 = ssub.s32 %s20, %s32
      %s62 = ssub.s32 %s21, %s28
      %s63 = sor.u32 %s61, %s62
      %p64 = scmp.eq.s32.totalorder %s63, 0
      %s66 = sadd.s32 %s65, 1
      %s67 = scalar_select %p64, %s65, %s66
      %p70 = pneg %p64
      %p71 = scmp.eq.s32.totalorder %s13, 1
      %p72 = por %p70, %p71
      %p73 = scmp.ne.s32.totalorder %s65, %s68
      %p74 = scmp.eq.s32.totalorder %s13, 0
      %p75 = por %p73, %p74
      %p76 = scmp.ne.s32.totalorder %s65, %s68
      %p77 = scmp.eq.s32.totalorder %s18, 1
      %p78 = por %p76, %p77
      %p79 = scmp.ne.s32.totalorder %s68, %s69
      %p80 = scmp.eq.s32.totalorder %s18, 0
      %p81 = por %p79, %p80
      %p82 = scmp.ne.s32.totalorder %s68, %s69
      %p83 = scmp.eq.s32.totalorder %s19, 1
      %p84 = por %p82, %p83
      %p86 = scmp.ne.s32.totalorder %s69, %s85
      %p87 = scmp.eq.s32.totalorder %s19, 0
      %p88 = por %p86, %p87
      %p89 = scmp.le.s32.totalorder 1, %s13
      %p90 = scmp.lt.s32.totalorder %s13, 3
      %p91 = pnand %p89, %p90
      %p92 = pneg %p91
      // Predicated region
      $region9: #{tpu_custom_call.1} parent=5 // pred_check
        _
      $region10: #{tpu_custom_call.1} parent=5 // pred_check_branch
        %94 = sbr.rel (%p91) target = $region12
      $region11: #{tpu_custom_call.1} parent=5 // pred_region
        %s95 = ssub.s32 %s13, 1
      $region12: #{tpu_custom_call.1} parent=5 // pred_fallthru
        _
      %p96 = scmp.lt.s32.totalorder %s13, 2
      // Predicated region
      $region13: #{tpu_custom_call.1} parent=5 // pred_check
        %p97 = pneg %p96
      $region14: #{tpu_custom_call.1} parent=5 // pred_check_branch
        %99 = sbr.rel (%p97) target = $region16
      $region15: #{tpu_custom_call.1} parent=5 // pred_region
        // Predicated region
        $region17: #{tpu_custom_call.1} parent=15 // pred_check
          %p100 = pneg %p47
        $region18: #{tpu_custom_call.1} parent=15 // pred_check_branch
          %102 = sbr.rel (%p100) target = $region20
        $region19: #{tpu_custom_call.1} parent=15 // pred_region
          %s103 = sand.u32 %s37, 1
          %s104 = scalar_lea.sflag [#allocation3], %s103
          %s105 = sand.u32 %s37, 1
          %s106 = smul.addr %s105, 24
          %s107 = scalar_lea.vmem [#allocation2], %s106
          %s109 = ssub.s32 384, 384
          %110 = vsyncadd %s104, %s109
          %s111 = smul.addr %s20, 3
          %s112 = sadd.s32 %s21, %s111
          %s113 = smul.addr %s112, 128
          %s114 = scalar_lea.hbm %s0, %s113
          %s115 = sshll.u32 %s107, 4
          %s116 = int_to_ptr.vmem [resolvable:$true] %s115
          %121 = dma.hbm_to_vmem [thread:$0]  %s114, 384, %s116, %s104, 128, 128, 8
        $region20: #{tpu_custom_call.1} parent=15 // pred_fallthru
          _
      $region16: #{tpu_custom_call.1} parent=5 // pred_fallthru
        _
      %p122 = scmp.le.s32.totalorder 1, %s13
      %p123 = scmp.lt.s32.totalorder %s13, 3
      %p124 = pnand %p122, %p123
      %p125 = pneg %p124
      // Predicated region
      $region21: #{tpu_custom_call.1} parent=5 // pred_check
        _
      $region22: #{tpu_custom_call.1} parent=5 // pred_check_branch
        %127 = sbr.rel (%p124) target = $region24
      $region23: #{tpu_custom_call.1} parent=5 // pred_region
        %s128 = ssub.s32 %s13, 1
        %s129 = sand.u32 %s40, 1
        %s130 = scalar_lea.sflag [#allocation3], %s129
        %s131 = sand.u32 %s40, 1
        %s132 = smul.addr %s131, 24
        %s133 = scalar_lea.vmem [#allocation2], %s132
        // Predicated region
        $region25: #{tpu_custom_call.1} parent=23 // pred_check
          %p134 = pneg %p53
        $region26: #{tpu_custom_call.1} parent=23 // pred_check_branch
          %136 = sbr.rel (%p134) target = $region28
        $region27: #{tpu_custom_call.1} parent=23 // pred_region
          %137 = dma.done %s130, 384
        $region28: #{tpu_custom_call.1} parent=23 // pred_fallthru
          _
        %s138 = sand.u32 %s40, 1
        %s139 = scalar_lea.sflag [#allocation3], %s138
        %s140 = sand.u32 %s40, 1
        %s141 = smul.addr %s140, 24
        %s142 = scalar_lea.vmem [#allocation2], %s141
        %p143 = pneg %p53
        %p144 = pneg %p50
        %p145 = pneg %p81
        %p146 = pneg %p78
        %s147 = sand.u32 %s68, 1
        %s148 = scalar_lea.sflag [#allocation4], %s147
        %s149 = sand.u32 %s68, 1
        %s150 = smul.addr %s149, 40
        %s151 = scalar_lea.vmem [#allocation5], %s150
        %v152 = vld [vmem:[%s133] sm:$0xff]
        %s153 = scalar_lea.vmem %s133, 8 [#allocation2]
        %v154 = vld [vmem:[%s153] sm:$0xff]
        %s155 = scalar_lea.vmem %s133, 16 [#allocation2]
        %v156 = vld [vmem:[%s155] sm:$0xff]
        %157 = vst [vmem:[%s151] sm:$0xff] %v152
        %v158 = vadd.f32 %v152, %v154
        %s159 = scalar_lea.vmem %s151, 8 [#allocation5]
        %160 = vst [vmem:[%s159] sm:$0xff] %v158
        %s161 = scalar_lea.vmem %s151, 16 [#allocation5]
        %162 = vst [vmem:[%s161] sm:$0xff] %v154
        %v163 = vadd.f32 %v154, %v156
        %s164 = scalar_lea.vmem %s151, 24 [#allocation5]
        %165 = vst [vmem:[%s164] sm:$0xff] %v163
        %s166 = scalar_lea.vmem %s151, 32 [#allocation5]
        %167 = vst [vmem:[%s166] sm:$0xff] 1.0
        %s168 = sand.u32 %s68, 1
        %s169 = scalar_lea.sflag [#allocation4], %s168
        %s170 = sand.u32 %s68, 1
        %s171 = smul.addr %s170, 40
        %s172 = scalar_lea.vmem [#allocation5], %s171
        // Predicated region
        $region29: #{tpu_custom_call.1} parent=23 // pred_check
          %p173 = pneg %p78
        $region30: #{tpu_custom_call.1} parent=23 // pred_check_branch
          %175 = sbr.rel (%p173) target = $region32
        $region31: #{tpu_custom_call.1} parent=23 // pred_region
          %s177 = ssub.s32 640, 640
          %178 = vsyncadd %s169, %s177
          %s179 = smul.addr %s22, 5
          %s180 = sadd.s32 %s23, %s179
          %s181 = smul.addr %s180, 128
          %s182 = scalar_lea.hbm %s1, %s181
          %s183 = sshll.u32 %s172, 4
          %s184 = int_to_ptr.vmem [resolvable:$true] %s183
          %189 = dma.vmem_to_hbm [thread:$0]  %s184, 640, %s182, %s169, 128, 128, 8
        $region32: #{tpu_custom_call.1} parent=23 // pred_fallthru
          _
      $region24: #{tpu_custom_call.1} parent=5 // pred_fallthru
        _
      %p190 = scmp.le.s32.totalorder 2, %s13
      // Predicated region
      $region33: #{tpu_custom_call.1} parent=5 // pred_check
        %p191 = pneg %p190
      $region34: #{tpu_custom_call.1} parent=5 // pred_check_branch
        %193 = sbr.rel (%p191) target = $region36
      $region35: #{tpu_custom_call.1} parent=5 // pred_region
        %s194 = ssub.s32 %s13, 2
        // Predicated region
        $region37: #{tpu_custom_call.1} parent=35 // pred_check
          %p195 = pneg %p84
        $region38: #{tpu_custom_call.1} parent=35 // pred_check_branch
          %197 = sbr.rel (%p195) target = $region40
        $region39: #{tpu_custom_call.1} parent=35 // pred_region
          %s198 = sand.u32 %s69, 1
          %s199 = scalar_lea.sflag [#allocation4], %s198
          %s200 = sand.u32 %s69, 1
          %s201 = smul.addr %s200, 40
          %s202 = scalar_lea.vmem [#allocation5], %s201
          %203 = dma.done %s199, 640
        $region40: #{tpu_custom_call.1} parent=35 // pred_fallthru
          _
      $region36: #{tpu_custom_call.1} parent=5 // pred_fallthru
        _
    $region6: #{tpu_custom_call.1} parent=1 // loop_footer
      %s17 = sadd.s32 1, %s13
    $region7: #{tpu_custom_call.1} parent=1 // loop_footer_branch
      %12 = sbr.rel target = $region3
    $region8: #{tpu_custom_call.1} parent=1 // loop_exit
      _
    %204 = vsyncpa [#allocation3], 1
    %s205 = scalar_lea.sflag [#allocation3], 1
    %206 = vsyncpa %s205, 1
    %207 = vsyncpa [#allocation4], 1
    %s208 = scalar_lea.sflag [#allocation4], 1
    %209 = vsyncpa %s208, 1

</llo_original>
